<compile_context>
chip_gen: v5e
topology: v5e:2x2
jax: 0.10.0
libtpu: 0.0.40
codegen_flags: <defaults>
</compile_context>

<pallas_src>
import math
import jax
import jax.numpy as jnp
from jax.experimental import pallas as pl
from jax.experimental.pallas import tpu as pltpu


def _round_up(x, m):
    return (x + m - 1) // m * m


def _make_fitting_kernel(n_layers, activation, residual, last_vpu):
    """Kernel closed over the static layer configuration.

    Args per call (PrefetchScalarGridSpec):
      ch_ref (SMEM, unused in body — consumed by the index_maps),
      x_ref (TB, in) compute-dtype,
      then per layer: w_ref, b_ref (type already selected by the index_map),
      finally out_ref (TB, 1) f32.
    """

    def kernel(ch_ref, x_ref, *refs):
        del ch_ref
        out_ref = refs[-1]
        wb = refs[:-1]
        h_lo = x_ref[...]                      # MXU operand (bf16 or f32)
        h = h_lo.astype(jnp.float32)           # f32 value for residual / VPU tail
        for l in range(n_layers):
            w_ref = wb[2 * l]
            b_ref = wb[2 * l + 1]              # (1, out_l) f32
            if last_vpu and l == n_layers - 1:
                # out_features == 1: elementwise mul + lane reduction (VPU/XLU),
                # skips a degenerate 1-column MXU push.  w_ref is (1, in_l) f32.
                y = jnp.sum(h * w_ref[...], axis=1, keepdims=True) + b_ref[...]
            else:
                # Single MXU matmul per layer (weight already (in_l, out_l)).
                y = jnp.dot(h_lo, w_ref[...],
                            preferred_element_type=jnp.float32) + b_ref[...]
            if activation[l]:
                y = jnp.tanh(y)
            if residual[l]:
                if y.shape[1] == h.shape[1]:
                    y = y + h
                elif y.shape[1] == 2 * h.shape[1]:
                    # avoid lane-axis concat; tile is a cheap lane copy
                    y = y + jnp.tile(h, (1, 2))
                else:
                    raise NotImplementedError("residual size mismatch")
            h = y
            h_lo = y.astype(x_ref.dtype)
        out_ref[...] = h.astype(out_ref.dtype)

    return kernel


def prepare_fitting_params(weights, biases, use_bf16=True):
    """One-time parameter prep (hoisted out of the per-call forward wrapper).

    weights[l]: (n_types, out_l, in_l) f32, biases[l]: (n_types, out_l) f32.
    Returns kernel-ready flat [w0,b0,w1,b1,...]:
      * hidden-layer weights transposed to (n_types, in_l, out_l), bf16 if requested
      * final 1-wide layer kept as (n_types, 1, in_l) f32 (VPU reduction path)
      * biases reshaped to (n_types, 1, out_l) f32
    """
    n_layers = len(weights)
    last_vpu = weights[-1].shape[1] == 1
    compute_dtype = jnp.bfloat16 if use_bf16 else jnp.float32
    kparams = []
    for l, (w, b) in enumerate(zip(weights, biases)):
        nt, of, inf = w.shape
        if last_vpu and l == n_layers - 1:
            kw = w.reshape(nt, 1, inf).astype(jnp.float32)
        else:
            kw = jnp.transpose(w, (0, 2, 1)).astype(compute_dtype)
        kb = b.reshape(nt, 1, of).astype(jnp.float32)
        kparams += [kw, kb]
    return kparams, last_vpu, compute_dtype


def fitting_forward_pallas(x, channels, kparams, activation, residual,
                           last_vpu, compute_dtype, tb_cap=2048):
    """x: (B, C, in_features) f32, channels: (C,) int. Returns (B, C, 1) f32."""
    B, C, IN = x.shape
    n_layers = len(activation)
    out_feat = kparams[-1].shape[-1]

    # Channel-major rows so each row tile holds exactly one channel/type.
    x_cm = jnp.transpose(x, (1, 0, 2)).astype(compute_dtype)   # (C, B, IN)

    sub = 16 if compute_dtype == jnp.bfloat16 else 8            # sublane packing
    B_p = _round_up(B, sub)
    TB = min(tb_cap, B_p)
    B_p = _round_up(B_p, TB)
    if B_p != B:
        x_cm = jnp.pad(x_cm, ((0, 0), (0, B_p - B), (0, 0)))    # padded rows sliced off

    # index_maps receive (c, b, *prefetch_refs); weight/bias blocks are selected
    # per channel from the scalar-prefetched `channels` table.
    x_map = lambda c, b, ch: (c, b, 0)
    w_map = lambda c, b, ch: (ch[c], 0, 0)

    in_specs = [pl.BlockSpec((None, TB, IN), x_map)]
    for p in kparams:
        in_specs.append(pl.BlockSpec((None,) + p.shape[1:], w_map))

    kernel = _make_fitting_kernel(n_layers, activation, residual, last_vpu)

    out_cm = pl.pallas_call(
        kernel,
        out_shape=jax.ShapeDtypeStruct((C, B_p, out_feat), jnp.float32),
        grid_spec=pltpu.PrefetchScalarGridSpec(
            num_scalar_prefetch=1,
            grid=(C, B_p // TB),
            in_specs=in_specs,
            out_specs=pl.BlockSpec((None, TB, out_feat), x_map),
        ),
        compiler_params=pltpu.CompilerParams(
            dimension_semantics=("parallel", "parallel")),
    )(channels.astype(jnp.int32), x_cm, *kparams)

    out = out_cm[:, :B, :]                    # (C, B, out_feat)
    return jnp.transpose(out, (1, 0, 2))      # (B, C, out_feat)


def init_fitting_params(key, n_types, in_features, neuron):
    """Deterministic synthetic init mirroring the PyTorch parameter shapes."""
    sizes = [in_features] + list(neuron) + [1]
    weights, biases = [], []
    for l in range(len(sizes) - 1):
        fin, fout = sizes[l], sizes[l + 1]
        key, k1, k2 = jax.random.split(key, 3)
        bound = 1.0 / math.sqrt(fin)          # kaiming(a=sqrt(5)) + bias bound
        weights.append(jax.random.uniform(
            k1, (n_types, fout, fin), jnp.float32, -bound, bound))
        biases.append(jax.random.uniform(
            k2, (n_types, fout), jnp.float32, -bound, bound))
    activation = [True] * len(neuron) + [False]
    residual = [False] + [True] * (len(neuron) - 1) + [False]
    return weights, biases, activation, residual


def fitting_forward_ref(x, channels, weights, biases, activation, residual):
    """Pure-JAX f32 reference reproducing the PyTorch forward exactly."""
    h = x
    for w, b, act, res in zip(weights, biases, activation, residual):
        wg = w[channels]                      # (C, out, in)
        bg = b[channels]                      # (C, out)
        y = jnp.einsum("bci,coi->bco", h, wg,
                       preferred_element_type=jnp.float32) + bg[None, :, :]
        if act:
            y = jnp.tanh(y)
        if res:
            if y.shape[2] == h.shape[2]:
                y = y + h
            elif y.shape[2] == 2 * h.shape[2]:
                y = y + jnp.concatenate([h, h], axis=2)
            else:
                raise NotImplementedError
        h = y
    return h


if __name__ == "__main__":
    # Small, module-consistent shapes.
    n_types = 3
    in_features = 32
    neuron = [64, 64, 64]
    B, C = 8, 4                               # B frames/atoms x C channels

    key = jax.random.PRNGKey(0)
    kx, kc, kp = jax.random.split(key, 3)

    x = jax.random.normal(kx, (B, C, in_features), dtype=jnp.float32)
    channels = jax.random.randint(kc, (C,), 0, n_types, dtype=jnp.int32)

    weights, biases, activation, residual = init_fitting_params(
        kp, n_types, in_features, neuron)

    # One-time parameter prep (transpose / bf16 cast hoisted out of the forward).
    kparams, last_vpu, cdtype = prepare_fitting_params(weights, biases, use_bf16=True)

    out = fitting_forward_pallas(x, channels, kparams, activation, residual,
                                 last_vpu, cdtype)
    out = jax.block_until_ready(out)
    assert out.shape == (B, C, 1), out.shape

    ref = fitting_forward_ref(x, channels, weights, biases, activation, residual)
    # bf16 MXU operands (x + hidden-layer weights) => looser tolerance than f32 ref.
    assert jnp.allclose(out, ref, rtol=3e-2, atol=3e-2), (
        float(jnp.max(jnp.abs(out - ref))))

    print("KERNEL_OK")
</pallas_src>

<mosaic_0001>
module attributes {stable_mosaic.version = 11 : i64} {
  func.func @kernel(%arg0: i32, %arg1: i32, %arg2: memref<4xi32, #tpu.memory_space<smem>>, %arg3: memref<1x16x32xbf16, #tpu.memory_space<vmem>>, %arg4: memref<1x32x64xbf16, #tpu.memory_space<vmem>>, %arg5: memref<1x1x64xf32, #tpu.memory_space<vmem>>, %arg6: memref<1x64x64xbf16, #tpu.memory_space<vmem>>, %arg7: memref<1x1x64xf32, #tpu.memory_space<vmem>>, %arg8: memref<1x64x64xbf16, #tpu.memory_space<vmem>>, %arg9: memref<1x1x64xf32, #tpu.memory_space<vmem>>, %arg10: memref<1x1x64xf32, #tpu.memory_space<vmem>>, %arg11: memref<1x1x1xf32, #tpu.memory_space<vmem>>, %arg12: memref<1x16x1xf32, #tpu.memory_space<vmem>>) attributes {dimension_semantics = [#tpu.dimension_semantics<parallel>, #tpu.dimension_semantics<parallel>], iteration_bounds = array<i64: 4, 1>, scalar_prefetch = 1 : i64, scratch_operands = 0 : i64, tpu.core_type = #tpu.core_type<tc>, window_params = [{transform_indices = @transform_0, window_bounds = array<i64: 1, 16, 32>}, {transform_indices = @transform_1, window_bounds = array<i64: 1, 32, 64>}, {transform_indices = @transform_2, window_bounds = array<i64: 1, 1, 64>}, {transform_indices = @transform_3, window_bounds = array<i64: 1, 64, 64>}, {transform_indices = @transform_4, window_bounds = array<i64: 1, 1, 64>}, {transform_indices = @transform_5, window_bounds = array<i64: 1, 64, 64>}, {transform_indices = @transform_6, window_bounds = array<i64: 1, 1, 64>}, {transform_indices = @transform_7, window_bounds = array<i64: 1, 1, 64>}, {transform_indices = @transform_8, window_bounds = array<i64: 1, 1, 1>}, {transform_indices = @transform_9, window_bounds = array<i64: 1, 16, 1>}]} {
    %c0 = arith.constant 0 : index
    %c0_0 = arith.constant 0 : index
    %c0_1 = arith.constant 0 : index
    %0 = vector.load %arg3[%c0, %c0_0, %c0_1] : memref<1x16x32xbf16, #tpu.memory_space<vmem>>, vector<1x16x32xbf16>
    %1 = vector.shape_cast %0 : vector<1x16x32xbf16> to vector<16x32xbf16>
    %c0_2 = arith.constant 0 : index
    %c0_3 = arith.constant 0 : index
    %c0_4 = arith.constant 0 : index
    %2 = vector.load %arg4[%c0_2, %c0_3, %c0_4] : memref<1x32x64xbf16, #tpu.memory_space<vmem>>, vector<1x32x64xbf16>
    %3 = vector.shape_cast %2 : vector<1x32x64xbf16> to vector<32x64xbf16>
    %cst = arith.constant dense<0.000000e+00> : vector<16x64xf32>
    %4 = tpu.matmul %1, %3, %cst {dimension_numbers = #tpu.dot_dimension_numbers<[1], [0], [0], [1], [0, 0, 1, 1], [], []>} : vector<16x32xbf16>, vector<32x64xbf16>, vector<16x64xf32> -> vector<16x64xf32>
    %c0_5 = arith.constant 0 : index
    %c0_6 = arith.constant 0 : index
    %c0_7 = arith.constant 0 : index
    %5 = vector.load %arg5[%c0_5, %c0_6, %c0_7] : memref<1x1x64xf32, #tpu.memory_space<vmem>>, vector<1x1x64xf32>
    %6 = vector.shape_cast %5 : vector<1x1x64xf32> to vector<1x64xf32>
    %7 = vector.broadcast %6 : vector<1x64xf32> to vector<16x64xf32>
    %8 = arith.addf %4, %7 : vector<16x64xf32>
    %9 = math.tanh %8 : vector<16x64xf32>
    %10 = arith.truncf %9 : vector<16x64xf32> to vector<16x64xbf16>
    %c0_8 = arith.constant 0 : index
    %c0_9 = arith.constant 0 : index
    %c0_10 = arith.constant 0 : index
    %11 = vector.load %arg6[%c0_8, %c0_9, %c0_10] : memref<1x64x64xbf16, #tpu.memory_space<vmem>>, vector<1x64x64xbf16>
    %12 = vector.shape_cast %11 : vector<1x64x64xbf16> to vector<64x64xbf16>
    %cst_11 = arith.constant dense<0.000000e+00> : vector<16x64xf32>
    %13 = tpu.matmul %10, %12, %cst_11 {dimension_numbers = #tpu.dot_dimension_numbers<[1], [0], [0], [1], [0, 0, 1, 1], [], []>} : vector<16x64xbf16>, vector<64x64xbf16>, vector<16x64xf32> -> vector<16x64xf32>
    %c0_12 = arith.constant 0 : index
    %c0_13 = arith.constant 0 : index
    %c0_14 = arith.constant 0 : index
    %14 = vector.load %arg7[%c0_12, %c0_13, %c0_14] : memref<1x1x64xf32, #tpu.memory_space<vmem>>, vector<1x1x64xf32>
    %15 = vector.shape_cast %14 : vector<1x1x64xf32> to vector<1x64xf32>
    %16 = vector.broadcast %15 : vector<1x64xf32> to vector<16x64xf32>
    %17 = arith.addf %13, %16 : vector<16x64xf32>
    %18 = math.tanh %17 : vector<16x64xf32>
    %19 = arith.addf %18, %9 : vector<16x64xf32>
    %20 = arith.truncf %19 : vector<16x64xf32> to vector<16x64xbf16>
    %c0_15 = arith.constant 0 : index
    %c0_16 = arith.constant 0 : index
    %c0_17 = arith.constant 0 : index
    %21 = vector.load %arg8[%c0_15, %c0_16, %c0_17] : memref<1x64x64xbf16, #tpu.memory_space<vmem>>, vector<1x64x64xbf16>
    %22 = vector.shape_cast %21 : vector<1x64x64xbf16> to vector<64x64xbf16>
    %cst_18 = arith.constant dense<0.000000e+00> : vector<16x64xf32>
    %23 = tpu.matmul %20, %22, %cst_18 {dimension_numbers = #tpu.dot_dimension_numbers<[1], [0], [0], [1], [0, 0, 1, 1], [], []>} : vector<16x64xbf16>, vector<64x64xbf16>, vector<16x64xf32> -> vector<16x64xf32>
    %c0_19 = arith.constant 0 : index
    %c0_20 = arith.constant 0 : index
    %c0_21 = arith.constant 0 : index
    %24 = vector.load %arg9[%c0_19, %c0_20, %c0_21] : memref<1x1x64xf32, #tpu.memory_space<vmem>>, vector<1x1x64xf32>
    %25 = vector.shape_cast %24 : vector<1x1x64xf32> to vector<1x64xf32>
    %26 = vector.broadcast %25 : vector<1x64xf32> to vector<16x64xf32>
    %27 = arith.addf %23, %26 : vector<16x64xf32>
    %28 = math.tanh %27 : vector<16x64xf32>
    %29 = arith.addf %28, %19 : vector<16x64xf32>
    %c0_22 = arith.constant 0 : index
    %c0_23 = arith.constant 0 : index
    %c0_24 = arith.constant 0 : index
    %30 = vector.load %arg10[%c0_22, %c0_23, %c0_24] : memref<1x1x64xf32, #tpu.memory_space<vmem>>, vector<1x1x64xf32>
    %31 = vector.shape_cast %30 : vector<1x1x64xf32> to vector<1x64xf32>
    %32 = vector.broadcast %31 : vector<1x64xf32> to vector<16x64xf32>
    %33 = arith.mulf %29, %32 : vector<16x64xf32>
    %cst_25 = arith.constant dense<0.000000e+00> : vector<16xf32>
    %34 = vector.multi_reduction <add>, %33, %cst_25 [1] : vector<16x64xf32> to vector<16xf32>
    %35 = vector.shape_cast %34 : vector<16xf32> to vector<16x1xf32>
    %c0_26 = arith.constant 0 : index
    %c0_27 = arith.constant 0 : index
    %c0_28 = arith.constant 0 : index
    %36 = vector.load %arg11[%c0_26, %c0_27, %c0_28] : memref<1x1x1xf32, #tpu.memory_space<vmem>>, vector<1x1x1xf32>
    %37 = vector.shape_cast %36 : vector<1x1x1xf32> to vector<1x1xf32>
    %38 = vector.broadcast %37 : vector<1x1xf32> to vector<16x1xf32>
    %39 = arith.addf %35, %38 : vector<16x1xf32>
    %c0_29 = arith.constant 0 : index
    %c0_30 = arith.constant 0 : index
    %c0_31 = arith.constant 0 : index
    %40 = vector.load %arg12[%c0_29, %c0_30, %c0_31] : memref<1x16x1xf32, #tpu.memory_space<vmem>>, vector<1x16x1xf32>
    %41 = vector.shape_cast %40 : vector<1x16x1xf32> to vector<16x1xf32>
    %42 = vector.shape_cast %39 : vector<16x1xf32> to vector<1x16x1xf32>
    tpu.vector_store %arg12[%c0_29, %c0_30, %c0_31], %42 {strides = array<i32>} : memref<1x16x1xf32, #tpu.memory_space<vmem>>, vector<1x16x1xf32>,
    return
  }
  func.func @transform_0(%arg0: i32, %arg1: i32, %arg2: memref<4xi32, #tpu.memory_space<smem>>) -> (i32, i32, i32) {
    %c0_i32 = arith.constant 0 : i32
    %c0_i32_0 = arith.constant 0 : i32
    return %arg0, %arg1, %c0_i32 : i32, i32, i32
  }
  func.func @transform_1(%arg0: i32, %arg1: i32, %arg2: memref<4xi32, #tpu.memory_space<smem>>) -> (i32, i32, i32) {
    %0 = arith.index_cast %arg0 : i32 to index
    %1 = memref.load %arg2[%0] : memref<4xi32, #tpu.memory_space<smem>>
    %c0_i32 = arith.constant 0 : i32
    %c0_i32_0 = arith.constant 0 : i32
    %c0_i32_1 = arith.constant 0 : i32
    return %1, %c0_i32, %c0_i32_0 : i32, i32, i32
  }
  func.func @transform_2(%arg0: i32, %arg1: i32, %arg2: memref<4xi32, #tpu.memory_space<smem>>) -> (i32, i32, i32) {
    %0 = arith.index_cast %arg0 : i32 to index
    %1 = memref.load %arg2[%0] : memref<4xi32, #tpu.memory_space<smem>>
    %c0_i32 = arith.constant 0 : i32
    %c0_i32_0 = arith.constant 0 : i32
    %c0_i32_1 = arith.constant 0 : i32
    return %1, %c0_i32, %c0_i32_0 : i32, i32, i32
  }
  func.func @transform_3(%arg0: i32, %arg1: i32, %arg2: memref<4xi32, #tpu.memory_space<smem>>) -> (i32, i32, i32) {
    %0 = arith.index_cast %arg0 : i32 to index
    %1 = memref.load %arg2[%0] : memref<4xi32, #tpu.memory_space<smem>>
    %c0_i32 = arith.constant 0 : i32
    %c0_i32_0 = arith.constant 0 : i32
    %c0_i32_1 = arith.constant 0 : i32
    return %1, %c0_i32, %c0_i32_0 : i32, i32, i32
  }
  func.func @transform_4(%arg0: i32, %arg1: i32, %arg2: memref<4xi32, #tpu.memory_space<smem>>) -> (i32, i32, i32) {
    %0 = arith.index_cast %arg0 : i32 to index
    %1 = memref.load %arg2[%0] : memref<4xi32, #tpu.memory_space<smem>>
    %c0_i32 = arith.constant 0 : i32
    %c0_i32_0 = arith.constant 0 : i32
    %c0_i32_1 = arith.constant 0 : i32
    return %1, %c0_i32, %c0_i32_0 : i32, i32, i32
  }
  func.func @transform_5(%arg0: i32, %arg1: i32, %arg2: memref<4xi32, #tpu.memory_space<smem>>) -> (i32, i32, i32) {
    %0 = arith.index_cast %arg0 : i32 to index
    %1 = memref.load %arg2[%0] : memref<4xi32, #tpu.memory_space<smem>>
    %c0_i32 = arith.constant 0 : i32
    %c0_i32_0 = arith.constant 0 : i32
    %c0_i32_1 = arith.constant 0 : i32
    return %1, %c0_i32, %c0_i32_0 : i32, i32, i32
  }
  func.func @transform_6(%arg0: i32, %arg1: i32, %arg2: memref<4xi32, #tpu.memory_space<smem>>) -> (i32, i32, i32) {
    %0 = arith.index_cast %arg0 : i32 to index
    %1 = memref.load %arg2[%0] : memref<4xi32, #tpu.memory_space<smem>>
    %c0_i32 = arith.constant 0 : i32
    %c0_i32_0 = arith.constant 0 : i32
    %c0_i32_1 = arith.constant 0 : i32
    return %1, %c0_i32, %c0_i32_0 : i32, i32, i32
  }
  func.func @transform_7(%arg0: i32, %arg1: i32, %arg2: memref<4xi32, #tpu.memory_space<smem>>) -> (i32, i32, i32) {
    %0 = arith.index_cast %arg0 : i32 to index
    %1 = memref.load %arg2[%0] : memref<4xi32, #tpu.memory_space<smem>>
    %c0_i32 = arith.constant 0 : i32
    %c0_i32_0 = arith.constant 0 : i32
    %c0_i32_1 = arith.constant 0 : i32
    return %1, %c0_i32, %c0_i32_0 : i32, i32, i32
  }
  func.func @transform_8(%arg0: i32, %arg1: i32, %arg2: memref<4xi32, #tpu.memory_space<smem>>) -> (i32, i32, i32) {
    %0 = arith.index_cast %arg0 : i32 to index
    %1 = memref.load %arg2[%0] : memref<4xi32, #tpu.memory_space<smem>>
    %c0_i32 = arith.constant 0 : i32
    %c0_i32_0 = arith.constant 0 : i32
    %c0_i32_1 = arith.constant 0 : i32
    return %1, %c0_i32, %c0_i32_0 : i32, i32, i32
  }
  func.func @transform_9(%arg0: i32, %arg1: i32, %arg2: memref<4xi32, #tpu.memory_space<smem>>) -> (i32, i32, i32) {
    %c0_i32 = arith.constant 0 : i32
    %c0_i32_0 = arith.constant 0 : i32
    return %arg0, %arg1, %c0_i32 : i32, i32, i32
  }
}

</mosaic_0001>

<llo_original>
// kernel: tpu_custom_call.1
$region0: #{tpu_custom_call.1}
  #allocation0 [shape = 'u32[]', space=smem, size = 0x4, offset = 0x4, fixed_abs, tag = 'smem constant byte address 0x4 - core index']
  #allocation1 [shape = 'u32[72,128]{1,0:T(1,128)}', space=vmem, size = 0x9000, scoped, tag = 'internal scratch']
  #allocation2 [shape = 's32[1]{0}', space=sflag, size = 0x4, scoped, tag = 'scoped memory for tpu_custom_call.1']
  #allocation3 [shape = 'u8[512]{0}', space=smem, size = 0x200, scoped, tag = 'prefetched SMEM operand 0']
  %s0 = inlined_call_operand.vmem [shape: s32[4], index: 0, kind: input, shape index: {}]
  %s1 = inlined_call_operand.hbm [shape: bf16[4,16,32], index: 1, kind: input, shape index: {}]
  %s2 = inlined_call_operand.hbm [shape: bf16[3,32,64], index: 2, kind: input, shape index: {}]
  %s3 = inlined_call_operand.vmem [shape: f32[3,1,64], index: 3, kind: input, shape index: {}]
  %s4 = inlined_call_operand.hbm [shape: bf16[3,64,64], index: 4, kind: input, shape index: {}]
  %s5 = inlined_call_operand.vmem [shape: f32[3,1,64], index: 5, kind: input, shape index: {}]
  %s6 = inlined_call_operand.hbm [shape: bf16[3,64,64], index: 6, kind: input, shape index: {}]
  %s7 = inlined_call_operand.hbm [shape: f32[3,1,64], index: 7, kind: input, shape index: {}]
  %s8 = inlined_call_operand.vmem [shape: f32[3,1,64], index: 8, kind: input, shape index: {}]
  %s9 = inlined_call_operand.vmem [shape: f32[3,1,1], index: 9, kind: input, shape index: {}]
  %s10 = inlined_call_operand.vmem [shape: f32[4,16,1], index: 10, kind: output, shape index: {}]
  %s11 = sld [smem:[#allocation0]]
  $region89: #{tpu_custom_call.1} parent=0
    _
  %s13 = ssub.s32 1, %s11
  %s14 = scalar_select 0, %s13, %s11
  %s16 = sshll.u32 %s0, 4
  %s17 = int_to_ptr.vmem [resolvable:$true] %s16
  %19 = dma.vmem_to_smem %s17, 16, [#allocation3], [#allocation2]
  %21 = dma.done [#allocation2], 16
  %22 = sfence
  $region1: #{tpu_custom_call.1} parent=0
    #allocation4 [shape = 'u8[8192]{0}', space=vmem, size = 0x2000, scoped, tag = 'input window, operand 1']
    #allocation5 [shape = 's32[2]{0}', space=sflag, size = 0x8, scoped, tag = 'scoped memory for tpu_custom_call.1']
    #allocation6 [shape = 'u8[16384]{0}', space=vmem, size = 0x4000, scoped, tag = 'input window, operand 2']
    #allocation7 [shape = 's32[2]{0}', space=sflag, size = 0x8, scoped, tag = 'scoped memory for tpu_custom_call.1']
    #allocation8 [shape = 'u8[32768]{0}', space=vmem, size = 0x8000, scoped, tag = 'input window, operand 4']
    #allocation9 [shape = 'u8[32768]{0}', space=vmem, size = 0x8000, scoped, tag = 'input window, operand 6']
    #allocation10 [shape = 's32[2]{0}', space=sflag, size = 0x8, scoped, tag = 'scoped memory for tpu_custom_call.1']
    #allocation11 [shape = 'u8[1024]{0}', space=vmem, size = 0x400, scoped, tag = 'input window, operand 7']
    %23 = vsyncpa [#allocation5], 0
    %s24 = scalar_lea.sflag [#allocation5], 1
    %25 = vsyncpa %s24, 0
    %26 = vsyncpa [#allocation7], 0
    %s27 = scalar_lea.sflag [#allocation7], 1
    %28 = vsyncpa %s27, 0
    %29 = vsyncpa [#allocation10], 0
    %s30 = scalar_lea.sflag [#allocation10], 1
    %31 = vsyncpa %s30, 0
    loop: start=0, step=1, limit=6
    $region2: #{tpu_custom_call.1} parent=1 // loop_pre_header
      _
    $region3: #{tpu_custom_call.1} parent=1 // loop_header
      %s33 = sphi 0, %s37
      %p34 = scmp.ge.s32.totalorder %s33, 6
      %s40 = sphi 0, %s52
      %s41 = sphi 0, %s48
      %s42 = sphi 0, %s40
      %s43 = sphi 0, %s41
      %s44 = sphi 0, %s42
      %s45 = sphi 0, %s43
      %s57 = sphi 0, %s59
      %s60 = sphi 0, %s57
      %s61 = sphi 0, %s60
      %s77 = sphi 0, %s61
      %s85 = sphi 0, %s87
      %s88 = sphi 0, %s85
      %s89 = sphi 0, %s88
      %s105 = sphi 0, %s89
      %s113 = sphi 0, %s115
      %s116 = sphi 0, %s113
      %s117 = sphi 0, %s116
      %s133 = sphi 0, %s117
      %s141 = sphi 0, %s143
      %s144 = sphi 0, %s141
      %s145 = sphi 0, %s144
      %s161 = sphi 0, %s145
      %s169 = sphi 0, %s171
      %s172 = sphi 0, %s169
      %s173 = sphi 0, %s172
      %s189 = sphi 0, %s173
      %s197 = sphi 0, %s199
      %s200 = sphi 0, %s197
      %s201 = sphi 0, %s200
      %s217 = sphi 0, %s201
      %s225 = sphi 0, %s227
      %s228 = sphi 0, %s225
      %s229 = sphi 0, %s228
      %s245 = sphi 0, %s229
      %s253 = sphi 0, %s255
      %s256 = sphi 0, %s253
      %s257 = sphi 0, %s256
      %s273 = sphi 0, %s257
      %s281 = sphi 0, %s283
      %s284 = sphi 0, %s281
      %s285 = sphi 0, %s284
      %s301 = sphi 0, %s285
      %s309 = sphi 0, %s311
      %s312 = sphi 0, %s309
      %s313 = sphi 0, %s312
      %s329 = sphi 0, %s313
    $region4: #{tpu_custom_call.1} parent=1 // loop_header_branch
      %36 = sbr.rel (%p34) target = $region8
    $region5: #{tpu_custom_call.1} parent=1 // loop_body
      %s38 = ssub.s32 %s33, 1
      %s39 = ssub.s32 %s33, 2
      %s46 = sadd.s32 1, %s41
      %p47 = scmp.ge.s32.totalorder %s46, 1
      %s48 = scalar_select %p47, 0, %s46
      %s49 = sadd.s32 1, %s40
      %s50 = scalar_select %p47, %s49, %s40
      %p51 = scmp.ge.s32.totalorder %s50, 4
      %s52 = scalar_select %p51, 0, %s50
      %s53 = ssub.s32 %s40, %s52
      %s54 = ssub.s32 %s41, %s48
      %s55 = sor.u32 %s53, %s54
      %p56 = scmp.eq.s32.totalorder %s55, 0
      %s58 = sadd.s32 %s57, 1
      %s59 = scalar_select %p56, %s57, %s58
      %p62 = pneg %p56
      %p63 = scmp.eq.s32.totalorder %s33, 3
      %p64 = por %p62, %p63
      %p65 = scmp.ne.s32.totalorder %s57, %s60
      %p66 = scmp.eq.s32.totalorder %s33, 0
      %p67 = por %p65, %p66
      %p68 = scmp.ne.s32.totalorder %s57, %s60
      %p69 = scmp.eq.s32.totalorder %s38, 3
      %p70 = por %p68, %p69
      %p71 = scmp.ne.s32.totalorder %s60, %s61
      %p72 = scmp.eq.s32.totalorder %s38, 0
      %p73 = por %p71, %p72
      %p74 = scmp.ne.s32.totalorder %s60, %s61
      %p75 = scmp.eq.s32.totalorder %s39, 3
      %p76 = por %p74, %p75
      %p78 = scmp.ne.s32.totalorder %s61, %s77
      %p79 = scmp.eq.s32.totalorder %s39, 0
      %p80 = por %p78, %p79
      %s81 = sld [smem:[#allocation3 + %s40]]
      %s82 = sld [smem:[#allocation3 + %s52]]
      %s83 = ssub.s32 %s81, %s82
      %p84 = scmp.eq.s32.totalorder %s83, 0
      %s86 = sadd.s32 %s85, 1
      %s87 = scalar_select %p84, %s85, %s86
      %p90 = pneg %p84
      %p91 = scmp.eq.s32.totalorder %s33, 3
      %p92 = por %p90, %p91
      %p93 = scmp.ne.s32.totalorder %s85, %s88
      %p94 = scmp.eq.s32.totalorder %s33, 0
      %p95 = por %p93, %p94
      %p96 = scmp.ne.s32.totalorder %s85, %s88
      %p97 = scmp.eq.s32.totalorder %s38, 3
      %p98 = por %p96, %p97
      %p99 = scmp.ne.s32.totalorder %s88, %s89
      %p100 = scmp.eq.s32.totalorder %s38, 0
      %p101 = por %p99, %p100
      %p102 = scmp.ne.s32.totalorder %s88, %s89
      %p103 = scmp.eq.s32.totalorder %s39, 3
      %p104 = por %p102, %p103
      %p106 = scmp.ne.s32.totalorder %s89, %s105
      %p107 = scmp.eq.s32.totalorder %s39, 0
      %p108 = por %p106, %p107
      %s109 = sld [smem:[#allocation3 + %s40]]
      %s110 = sld [smem:[#allocation3 + %s52]]
      %s111 = ssub.s32 %s109, %s110
      %p112 = scmp.eq.s32.totalorder %s111, 0
      %s114 = sadd.s32 %s113, 1
      %s115 = scalar_select %p112, %s113, %s114
      %p118 = pneg %p112
      %p119 = scmp.eq.s32.totalorder %s33, 3
      %p120 = por %p118, %p119
      %p121 = scmp.ne.s32.totalorder %s113, %s116
      %p122 = scmp.eq.s32.totalorder %s33, 0
      %p123 = por %p121, %p122
      %p124 = scmp.ne.s32.totalorder %s113, %s116
      %p125 = scmp.eq.s32.totalorder %s38, 3
      %p126 = por %p124, %p125
      %p127 = scmp.ne.s32.totalorder %s116, %s117
      %p128 = scmp.eq.s32.totalorder %s38, 0
      %p129 = por %p127, %p128
      %p130 = scmp.ne.s32.totalorder %s116, %s117
      %p131 = scmp.eq.s32.totalorder %s39, 3
      %p132 = por %p130, %p131
      %p134 = scmp.ne.s32.totalorder %s117, %s133
      %p135 = scmp.eq.s32.totalorder %s39, 0
      %p136 = por %p134, %p135
      %s137 = sld [smem:[#allocation3 + %s40]]
      %s138 = sld [smem:[#allocation3 + %s52]]
      %s139 = ssub.s32 %s137, %s138
      %p140 = scmp.eq.s32.totalorder %s139, 0
      %s142 = sadd.s32 %s141, 1
      %s143 = scalar_select %p140, %s141, %s142
      %p146 = pneg %p140
      %p147 = scmp.eq.s32.totalorder %s33, 3
      %p148 = por %p146, %p147
      %p149 = scmp.ne.s32.totalorder %s141, %s144
      %p150 = scmp.eq.s32.totalorder %s33, 0
      %p151 = por %p149, %p150
      %p152 = scmp.ne.s32.totalorder %s141, %s144
      %p153 = scmp.eq.s32.totalorder %s38, 3
      %p154 = por %p152, %p153
      %p155 = scmp.ne.s32.totalorder %s144, %s145
      %p156 = scmp.eq.s32.totalorder %s38, 0
      %p157 = por %p155, %p156
      %p158 = scmp.ne.s32.totalorder %s144, %s145
      %p159 = scmp.eq.s32.totalorder %s39, 3
      %p160 = por %p158, %p159
      %p162 = scmp.ne.s32.totalorder %s145, %s161
      %p163 = scmp.eq.s32.totalorder %s39, 0
      %p164 = por %p162, %p163
      %s165 = sld [smem:[#allocation3 + %s40]]
      %s166 = sld [smem:[#allocation3 + %s52]]
      %s167 = ssub.s32 %s165, %s166
      %p168 = scmp.eq.s32.totalorder %s167, 0
      %s170 = sadd.s32 %s169, 1
      %s171 = scalar_select %p168, %s169, %s170
      %p174 = pneg %p168
      %p175 = scmp.eq.s32.totalorder %s33, 3
      %p176 = por %p174, %p175
      %p177 = scmp.ne.s32.totalorder %s169, %s172
      %p178 = scmp.eq.s32.totalorder %s33, 0
      %p179 = por %p177, %p178
      %p180 = scmp.ne.s32.totalorder %s169, %s172
      %p181 = scmp.eq.s32.totalorder %s38, 3
      %p182 = por %p180, %p181
      %p183 = scmp.ne.s32.totalorder %s172, %s173
      %p184 = scmp.eq.s32.totalorder %s38, 0
      %p185 = por %p183, %p184
      %p186 = scmp.ne.s32.totalorder %s172, %s173
      %p187 = scmp.eq.s32.totalorder %s39, 3
      %p188 = por %p186, %p187
      %p190 = scmp.ne.s32.totalorder %s173, %s189
      %p191 = scmp.eq.s32.totalorder %s39, 0
      %p192 = por %p190, %p191
      %s193 = sld [smem:[#allocation3 + %s40]]
      %s194 = sld [smem:[#allocation3 + %s52]]
      %s195 = ssub.s32 %s193, %s194
      %p196 = scmp.eq.s32.totalorder %s195, 0
      %s198 = sadd.s32 %s197, 1
      %s199 = scalar_select %p196, %s197, %s198
      %p202 = pneg %p196
      %p203 = scmp.eq.s32.totalorder %s33, 3
      %p204 = por %p202, %p203
      %p205 = scmp.ne.s32.totalorder %s197, %s200
      %p206 = scmp.eq.s32.totalorder %s33, 0
      %p207 = por %p205, %p206
      %p208 = scmp.ne.s32.totalorder %s197, %s200
      %p209 = scmp.eq.s32.totalorder %s38, 3
      %p210 = por %p208, %p209
      %p211 = scmp.ne.s32.totalorder %s200, %s201
      %p212 = scmp.eq.s32.totalorder %s38, 0
      %p213 = por %p211, %p212
      %p214 = scmp.ne.s32.totalorder %s200, %s201
      %p215 = scmp.eq.s32.totalorder %s39, 3
      %p216 = por %p214, %p215
      %p218 = scmp.ne.s32.totalorder %s201, %s217
      %p219 = scmp.eq.s32.totalorder %s39, 0
      %p220 = por %p218, %p219
      %s221 = sld [smem:[#allocation3 + %s40]]
      %s222 = sld [smem:[#allocation3 + %s52]]
      %s223 = ssub.s32 %s221, %s222
      %p224 = scmp.eq.s32.totalorder %s223, 0
      %s226 = sadd.s32 %s225, 1
      %s227 = scalar_select %p224, %s225, %s226
      %p230 = pneg %p224
      %p231 = scmp.eq.s32.totalorder %s33, 3
      %p232 = por %p230, %p231
      %p233 = scmp.ne.s32.totalorder %s225, %s228
      %p234 = scmp.eq.s32.totalorder %s33, 0
      %p235 = por %p233, %p234
      %p236 = scmp.ne.s32.totalorder %s225, %s228
      %p237 = scmp.eq.s32.totalorder %s38, 3
      %p238 = por %p236, %p237
      %p239 = scmp.ne.s32.totalorder %s228, %s229
      %p240 = scmp.eq.s32.totalorder %s38, 0
      %p241 = por %p239, %p240
      %p242 = scmp.ne.s32.totalorder %s228, %s229
      %p243 = scmp.eq.s32.totalorder %s39, 3
      %p244 = por %p242, %p243
      %p246 = scmp.ne.s32.totalorder %s229, %s245
      %p247 = scmp.eq.s32.totalorder %s39, 0
      %p248 = por %p246, %p247
      %s249 = sld [smem:[#allocation3 + %s40]]
      %s250 = sld [smem:[#allocation3 + %s52]]
      %s251 = ssub.s32 %s249, %s250
      %p252 = scmp.eq.s32.totalorder %s251, 0
      %s254 = sadd.s32 %s253, 1
      %s255 = scalar_select %p252, %s253, %s254
      %p258 = pneg %p252
      %p259 = scmp.eq.s32.totalorder %s33, 3
      %p260 = por %p258, %p259
      %p261 = scmp.ne.s32.totalorder %s253, %s256
      %p262 = scmp.eq.s32.totalorder %s33, 0
      %p263 = por %p261, %p262
      %p264 = scmp.ne.s32.totalorder %s253, %s256
      %p265 = scmp.eq.s32.totalorder %s38, 3
      %p266 = por %p264, %p265
      %p267 = scmp.ne.s32.totalorder %s256, %s257
      %p268 = scmp.eq.s32.totalorder %s38, 0
      %p269 = por %p267, %p268
      %p270 = scmp.ne.s32.totalorder %s256, %s257
      %p271 = scmp.eq.s32.totalorder %s39, 3
      %p272 = por %p270, %p271
      %p274 = scmp.ne.s32.totalorder %s257, %s273
      %p275 = scmp.eq.s32.totalorder %s39, 0
      %p276 = por %p274, %p275
      %s277 = sld [smem:[#allocation3 + %s40]]
      %s278 = sld [smem:[#allocation3 + %s52]]
      %s279 = ssub.s32 %s277, %s278
      %p280 = scmp.eq.s32.totalorder %s279, 0
      %s282 = sadd.s32 %s281, 1
      %s283 = scalar_select %p280, %s281, %s282
      %p286 = pneg %p280
      %p287 = scmp.eq.s32.totalorder %s33, 3
      %p288 = por %p286, %p287
      %p289 = scmp.ne.s32.totalorder %s281, %s284
      %p290 = scmp.eq.s32.totalorder %s33, 0
      %p291 = por %p289, %p290
      %p292 = scmp.ne.s32.totalorder %s281, %s284
      %p293 = scmp.eq.s32.totalorder %s38, 3
      %p294 = por %p292, %p293
      %p295 = scmp.ne.s32.totalorder %s284, %s285
      %p296 = scmp.eq.s32.totalorder %s38, 0
      %p297 = por %p295, %p296
      %p298 = scmp.ne.s32.totalorder %s284, %s285
      %p299 = scmp.eq.s32.totalorder %s39, 3
      %p300 = por %p298, %p299
      %p302 = scmp.ne.s32.totalorder %s285, %s301
      %p303 = scmp.eq.s32.totalorder %s39, 0
      %p304 = por %p302, %p303
      %s305 = ssub.s32 %s40, %s52
      %s306 = ssub.s32 %s41, %s48
      %s307 = sor.u32 %s305, %s306
      %p308 = scmp.eq.s32.totalorder %s307, 0
      %s310 = sadd.s32 %s309, 1
      %s311 = scalar_select %p308, %s309, %s310
      %p314 = pneg %p308
      %p315 = scmp.eq.s32.totalorder %s33, 3
      %p316 = por %p314, %p315
      %p317 = scmp.ne.s32.totalorder %s309, %s312
      %p318 = scmp.eq.s32.totalorder %s33, 0
      %p319 = por %p317, %p318
      %p320 = scmp.ne.s32.totalorder %s309, %s312
      %p321 = scmp.eq.s32.totalorder %s38, 3
      %p322 = por %p320, %p321
      %p323 = scmp.ne.s32.totalorder %s312, %s313
      %p324 = scmp.eq.s32.totalorder %s38, 0
      %p325 = por %p323, %p324
      %p326 = scmp.ne.s32.totalorder %s312, %s313
      %p327 = scmp.eq.s32.totalorder %s39, 3
      %p328 = por %p326, %p327
      %p330 = scmp.ne.s32.totalorder %s313, %s329
      %p331 = scmp.eq.s32.totalorder %s39, 0
      %p332 = por %p330, %p331
      %p333 = scmp.le.s32.totalorder 1, %s33
      %p334 = scmp.lt.s32.totalorder %s33, 5
      %p335 = pnand %p333, %p334
      %p336 = pneg %p335
      // Predicated region
      $region9: #{tpu_custom_call.1} parent=5 // pred_check
        _
      $region10: #{tpu_custom_call.1} parent=5 // pred_check_branch
        %338 = sbr.rel (%p335) target = $region12
      $region11: #{tpu_custom_call.1} parent=5 // pred_region
        %s339 = ssub.s32 %s33, 1
      $region12: #{tpu_custom_call.1} parent=5 // pred_fallthru
        _
      %p340 = scmp.lt.s32.totalorder %s33, 4
      // Predicated region
      $region13: #{tpu_custom_call.1} parent=5 // pred_check
        %p341 = pneg %p340
      $region14: #{tpu_custom_call.1} parent=5 // pred_check_branch
        %343 = sbr.rel (%p341) target = $region16
      $region15: #{tpu_custom_call.1} parent=5 // pred_region
        // Predicated region
        $region17: #{tpu_custom_call.1} parent=15 // pred_check
          %p344 = pneg %p67
        $region18: #{tpu_custom_call.1} parent=15 // pred_check_branch
          %346 = sbr.rel (%p344) target = $region20
        $region19: #{tpu_custom_call.1} parent=15 // pred_region
          %s347 = sand.u32 %s57, 1
          %s348 = scalar_lea.sflag [#allocation5], %s347
          %s349 = sand.u32 %s57, 1
          %s350 = smul.addr %s349, 8
          %s351 = scalar_lea.vmem [#allocation4], %s350
          %s352 = smul.u32 2, %s41
          %354 = vsyncadd %s348, 0
          %s355 = smul.addr %s40, 2
          %s356 = sadd.s32 %s352, %s355
          %s357 = smul.addr %s356, 4
          %s358 = scalar_lea.hbm %s1, %s357
          %s359 = sshll.u32 %s358, 4
          %s360 = int_to_ptr.hbm [resolvable:$true] %s359
          %s361 = sshll.u32 %s351, 4
          %s362 = int_to_ptr.vmem [resolvable:$true] %s361
          %367 = dma.hbm_to_vmem [thread:$0]  %s360, 128, %s362, %s348, 64, 64, 4
        $region20: #{tpu_custom_call.1} parent=15 // pred_fallthru
          _
        // Predicated region
        $region21: #{tpu_custom_call.1} parent=15 // pred_check
          %p368 = pneg %p95
        $region22: #{tpu_custom_call.1} parent=15 // pred_check_branch
          %370 = sbr.rel (%p368) target = $region24
        $region23: #{tpu_custom_call.1} parent=15 // pred_region
          %s371 = sand.u32 %s33, 1
          %s372 = scalar_lea.sflag [#allocation7], %s371
          %s373 = sand.u32 %s85, 1
          %s374 = smul.addr %s373, 16
          %s375 = scalar_lea.vmem [#allocation6], %s374
          %s376 = sld [smem:[#allocation3 + %s40]]
          %378 = vsyncadd %s372, 0
          %s379 = smul.addr %s376, 4
          %s380 = smul.addr %s379, 4
          %s381 = scalar_lea.hbm %s2, %s380
          %s382 = sshll.u32 %s381, 4
          %s383 = int_to_ptr.hbm [resolvable:$true] %s382
          %s384 = sshll.u32 %s375, 4
          %s385 = int_to_ptr.vmem [resolvable:$true] %s384
          %390 = dma.hbm_to_vmem [thread:$0]  %s383, 256, %s385, %s372, 64, 64, 4
        $region24: #{tpu_custom_call.1} parent=15 // pred_fallthru
          _
        // Predicated region
        $region25: #{tpu_custom_call.1} parent=15 // pred_check
          %p391 = pneg %p123
        $region26: #{tpu_custom_call.1} parent=15 // pred_check_branch
          %393 = sbr.rel (%p391) target = $region28
        $region27: #{tpu_custom_call.1} parent=15 // pred_region
          %s394 = sld [smem:[#allocation3 + %s40]]
          %p395 = scmp.lt.s32.totalorder %s394, 2
          %s396 = scalar_select %p395, %s394, 2
          %s397 = scalar_lea.vmem %s3, %s396
          %s398 = sld [smem:[#allocation3 + %s40]]
        $region28: #{tpu_custom_call.1} parent=15 // pred_fallthru
          _
        // Predicated region
        $region29: #{tpu_custom_call.1} parent=15 // pred_check
          %p399 = pneg %p151
        $region30: #{tpu_custom_call.1} parent=15 // pred_check_branch
          %401 = sbr.rel (%p399) target = $region32
        $region31: #{tpu_custom_call.1} parent=15 // pred_region
          %s402 = sand.u32 %s33, 1
          %s403 = scalar_lea.sflag [#allocation7], %s402
          %s404 = sand.u32 %s141, 1
          %s405 = smul.addr %s404, 32
          %s406 = scalar_lea.vmem [#allocation8], %s405
          %s407 = sld [smem:[#allocation3 + %s40]]
          %409 = vsyncadd %s403, 0
          %s410 = smul.addr %s407, 8
          %s411 = smul.addr %s410, 4
          %s412 = scalar_lea.hbm %s4, %s411
          %s413 = sshll.u32 %s412, 4
          %s414 = int_to_ptr.hbm [resolvable:$true] %s413
          %s415 = sshll.u32 %s406, 4
          %s416 = int_to_ptr.vmem [resolvable:$true] %s415
          %421 = dma.hbm_to_vmem [thread:$0]  %s414, 512, %s416, %s403, 64, 64, 4
        $region32: #{tpu_custom_call.1} parent=15 // pred_fallthru
          _
        // Predicated region
        $region33: #{tpu_custom_call.1} parent=15 // pred_check
          %p422 = pneg %p179
        $region34: #{tpu_custom_call.1} parent=15 // pred_check_branch
          %424 = sbr.rel (%p422) target = $region36
        $region35: #{tpu_custom_call.1} parent=15 // pred_region
          %s425 = sld [smem:[#allocation3 + %s40]]
          %p426 = scmp.lt.s32.totalorder %s425, 2
          %s427 = scalar_select %p426, %s425, 2
          %s428 = scalar_lea.vmem %s5, %s427
          %s429 = sld [smem:[#allocation3 + %s40]]
        $region36: #{tpu_custom_call.1} parent=15 // pred_fallthru
          _
        // Predicated region
        $region37: #{tpu_custom_call.1} parent=15 // pred_check
          %p430 = pneg %p207
        $region38: #{tpu_custom_call.1} parent=15 // pred_check_branch
          %432 = sbr.rel (%p430) target = $region40
        $region39: #{tpu_custom_call.1} parent=15 // pred_region
          %s433 = sand.u32 %s33, 1
          %s434 = scalar_lea.sflag [#allocation10], %s433
          %s435 = sand.u32 %s197, 1
          %s436 = smul.addr %s435, 32
          %s437 = scalar_lea.vmem [#allocation9], %s436
          %s438 = sld [smem:[#allocation3 + %s40]]
          %440 = vsyncadd %s434, 0
          %s441 = smul.addr %s438, 8
          %s442 = smul.addr %s441, 4
          %s443 = scalar_lea.hbm %s6, %s442
          %s444 = sshll.u32 %s443, 4
          %s445 = int_to_ptr.hbm [resolvable:$true] %s444
          %s446 = sshll.u32 %s437, 4
          %s447 = int_to_ptr.vmem [resolvable:$true] %s446
          %452 = dma.hbm_to_vmem [thread:$0]  %s445, 512, %s447, %s434, 64, 64, 4
        $region40: #{tpu_custom_call.1} parent=15 // pred_fallthru
          _
        // Predicated region
        $region41: #{tpu_custom_call.1} parent=15 // pred_check
          %p453 = pneg %p235
        $region42: #{tpu_custom_call.1} parent=15 // pred_check_branch
          %455 = sbr.rel (%p453) target = $region44
        $region43: #{tpu_custom_call.1} parent=15 // pred_region
          %s456 = sand.u32 %s33, 1
          %s457 = scalar_lea.sflag [#allocation10], %s456
          %s458 = sand.u32 %s225, 1
          %s459 = scalar_lea.vmem [#allocation11], %s458
          %s460 = sld [smem:[#allocation3 + %s40]]
          %462 = vsyncadd %s457, 0
          %s463 = scalar_lea.hbm %s7, %s460
          %s465 = sshll.u32 %s463, 4
          %s466 = int_to_ptr.hbm [resolvable:$true] %s465
          %s467 = sshll.u32 %s459, 4
          %s468 = int_to_ptr.vmem [resolvable:$true] %s467
          %470 = dma.hbm_to_vmem [thread:$0]  %s466, 16, %s468, %s457
        $region44: #{tpu_custom_call.1} parent=15 // pred_fallthru
          _
        // Predicated region
        $region45: #{tpu_custom_call.1} parent=15 // pred_check
          %p471 = pneg %p263
        $region46: #{tpu_custom_call.1} parent=15 // pred_check_branch
          %473 = sbr.rel (%p471) target = $region48
        $region47: #{tpu_custom_call.1} parent=15 // pred_region
          %s474 = sld [smem:[#allocation3 + %s40]]
          %p475 = scmp.lt.s32.totalorder %s474, 2
          %s476 = scalar_select %p475, %s474, 2
          %s477 = scalar_lea.vmem %s8, %s476
          %s478 = sld [smem:[#allocation3 + %s40]]
        $region48: #{tpu_custom_call.1} parent=15 // pred_fallthru
          _
        // Predicated region
        $region49: #{tpu_custom_call.1} parent=15 // pred_check
          %p479 = pneg %p291
        $region50: #{tpu_custom_call.1} parent=15 // pred_check_branch
          %481 = sbr.rel (%p479) target = $region52
        $region51: #{tpu_custom_call.1} parent=15 // pred_region
          %s482 = sld [smem:[#allocation3 + %s40]]
          %p483 = scmp.lt.s32.totalorder %s482, 2
          %s484 = scalar_select %p483, %s482, 2
          %s485 = scalar_lea.vmem %s9, %s484
          %s486 = sld [smem:[#allocation3 + %s40]]
        $region52: #{tpu_custom_call.1} parent=15 // pred_fallthru
          _
      $region16: #{tpu_custom_call.1} parent=5 // pred_fallthru
        _
      %p487 = scmp.le.s32.totalorder 1, %s33
      %p488 = scmp.lt.s32.totalorder %s33, 5
      %p489 = pnand %p487, %p488
      %p490 = pneg %p489
      // Predicated region
      $region53: #{tpu_custom_call.1} parent=5 // pred_check
        _
      $region54: #{tpu_custom_call.1} parent=5 // pred_check_branch
        %492 = sbr.rel (%p489) target = $region56
      $region55: #{tpu_custom_call.1} parent=5 // pred_region
        %s493 = ssub.s32 %s33, 1
        %s494 = sand.u32 %s60, 1
        %s495 = scalar_lea.sflag [#allocation5], %s494
        %s496 = sand.u32 %s60, 1
        %s497 = smul.addr %s496, 8
        %s498 = scalar_lea.vmem [#allocation4], %s497
        // Predicated region
        $region57: #{tpu_custom_call.1} parent=55 // pred_check
          %p499 = pneg %p73
        $region58: #{tpu_custom_call.1} parent=55 // pred_check_branch
          %501 = sbr.rel (%p499) target = $region60
        $region59: #{tpu_custom_call.1} parent=55 // pred_region
          %503 = dma.done %s495, 128
        $region60: #{tpu_custom_call.1} parent=55 // pred_fallthru
          _
        %s504 = sand.u32 %s38, 1
        %s505 = scalar_lea.sflag [#allocation7], %s504
        %s506 = sand.u32 %s88, 1
        %s507 = smul.addr %s506, 16
        %s508 = scalar_lea.vmem [#allocation6], %s507
        // Predicated region
        $region61: #{tpu_custom_call.1} parent=55 // pred_check
          %p509 = pneg %p101
        $region62: #{tpu_custom_call.1} parent=55 // pred_check_branch
          %511 = sbr.rel (%p509) target = $region64
        $region63: #{tpu_custom_call.1} parent=55 // pred_region
          %513 = dma.done %s505, 256
        $region64: #{tpu_custom_call.1} parent=55 // pred_fallthru
          _
        %s514 = sand.u32 %s38, 1
        %s515 = scalar_lea.sflag [#allocation7], %s514
        %s516 = sand.u32 %s144, 1
        %s517 = smul.addr %s516, 32
        %s518 = scalar_lea.vmem [#allocation8], %s517
        // Predicated region
        $region65: #{tpu_custom_call.1} parent=55 // pred_check
          %p519 = pneg %p157
        $region66: #{tpu_custom_call.1} parent=55 // pred_check_branch
          %521 = sbr.rel (%p519) target = $region68
        $region67: #{tpu_custom_call.1} parent=55 // pred_region
          %523 = dma.done %s515, 512
        $region68: #{tpu_custom_call.1} parent=55 // pred_fallthru
          _
        %s524 = sand.u32 %s38, 1
        %s525 = scalar_lea.sflag [#allocation10], %s524
        %s526 = sand.u32 %s200, 1
        %s527 = smul.addr %s526, 32
        %s528 = scalar_lea.vmem [#allocation9], %s527
        // Predicated region
        $region69: #{tpu_custom_call.1} parent=55 // pred_check
          %p529 = pneg %p213
        $region70: #{tpu_custom_call.1} parent=55 // pred_check_branch
          %531 = sbr.rel (%p529) target = $region72
        $region71: #{tpu_custom_call.1} parent=55 // pred_region
          %533 = dma.done %s525, 512
        $region72: #{tpu_custom_call.1} parent=55 // pred_fallthru
          _
        %s534 = sand.u32 %s38, 1
        %s535 = scalar_lea.sflag [#allocation10], %s534
        %s536 = sand.u32 %s228, 1
        %s537 = scalar_lea.vmem [#allocation11], %s536
        // Predicated region
        $region73: #{tpu_custom_call.1} parent=55 // pred_check
          %p538 = pneg %p241
        $region74: #{tpu_custom_call.1} parent=55 // pred_check_branch
          %540 = sbr.rel (%p538) target = $region76
        $region75: #{tpu_custom_call.1} parent=55 // pred_region
          %542 = dma.done %s535, 16
        $region76: #{tpu_custom_call.1} parent=55 // pred_fallthru
          _
        %s543 = sand.u32 %s60, 1
        %s544 = scalar_lea.sflag [#allocation5], %s543
        %s545 = sand.u32 %s60, 1
        %s546 = smul.addr %s545, 8
        %s547 = scalar_lea.vmem [#allocation4], %s546
        %p548 = pneg %p73
        %p549 = pneg %p70
        %s550 = sand.u32 %s38, 1
        %s551 = scalar_lea.sflag [#allocation7], %s550
        %s552 = sand.u32 %s88, 1
        %s553 = smul.addr %s552, 16
        %s554 = scalar_lea.vmem [#allocation6], %s553
        %p555 = pneg %p101
        %p556 = pneg %p98
        %s557 = sld [smem:[#allocation3 + %s42]]
        %p558 = scmp.lt.s32.totalorder %s557, 2
        %s559 = scalar_select %p558, %s557, 2
        %s560 = scalar_lea.vmem %s3, %s559
        %p561 = pneg %p129
        %p562 = pneg %p126
        %s563 = sand.u32 %s38, 1
        %s564 = scalar_lea.sflag [#allocation7], %s563
        %s565 = sand.u32 %s144, 1
        %s566 = smul.addr %s565, 32
        %s567 = scalar_lea.vmem [#allocation8], %s566
        %p568 = pneg %p157
        %p569 = pneg %p154
        %s570 = sld [smem:[#allocation3 + %s42]]
        %p571 = scmp.lt.s32.totalorder %s570, 2
        %s572 = scalar_select %p571, %s570, 2
        %s573 = scalar_lea.vmem %s5, %s572
        %p574 = pneg %p185
        %p575 = pneg %p182
        %s576 = sand.u32 %s38, 1
        %s577 = scalar_lea.sflag [#allocation10], %s576
        %s578 = sand.u32 %s200, 1
        %s579 = smul.addr %s578, 32
        %s580 = scalar_lea.vmem [#allocation9], %s579
        %p581 = pneg %p213
        %p582 = pneg %p210
        %s583 = sand.u32 %s38, 1
        %s584 = scalar_lea.sflag [#allocation10], %s583
        %s585 = sand.u32 %s228, 1
        %s586 = scalar_lea.vmem [#allocation11], %s585
        %p587 = pneg %p241
        %p588 = pneg %p238
        %s589 = sld [smem:[#allocation3 + %s42]]
        %p590 = scmp.lt.s32.totalorder %s589, 2
        %s591 = scalar_select %p590, %s589, 2
        %s592 = scalar_lea.vmem %s8, %s591
        %p593 = pneg %p269
        %p594 = pneg %p266
        %s595 = sld [smem:[#allocation3 + %s42]]
        %p596 = scmp.lt.s32.totalorder %s595, 2
        %s597 = scalar_select %p596, %s595, 2
        %s598 = scalar_lea.vmem %s9, %s597
        %p599 = pneg %p297
        %p600 = pneg %p294
        %p601 = pneg %p325
        %p602 = pneg %p322
        %s603 = smul.u32 2, %s43
        %p604 = scmp.lt.s32.totalorder %s42, 3
        %s605 = scalar_select %p604, %s42, 3
        %p606 = scmp.lt.s32.totalorder %s603, 1
        %s607 = scalar_select %p606, %s603, 1
        %s608 = smul.addr %s605, 2
        %s609 = sadd.s32 %s607, %s608
        %s610 = smul.addr %s609, 8
        %s611 = scalar_lea.vmem %s10, %s610
        %s612 = smul.u32 2, %s43
        %s613 = sld [smem:[#allocation3 + %s42]]
        %s614 = sld [smem:[#allocation3 + %s42]]
        %p615 = scmp.lt.s32.totalorder %s614, 2
        %s616 = scalar_select %p615, %s614, 2
        %s617 = scalar_lea.vmem %s3, %s616
        %s618 = sld [smem:[#allocation3 + %s42]]
        %s619 = sld [smem:[#allocation3 + %s42]]
        %s620 = sld [smem:[#allocation3 + %s42]]
        %p621 = scmp.lt.s32.totalorder %s620, 2
        %s622 = scalar_select %p621, %s620, 2
        %s623 = scalar_lea.vmem %s5, %s622
        %s624 = sld [smem:[#allocation3 + %s42]]
        %s625 = sld [smem:[#allocation3 + %s42]]
        %s626 = sld [smem:[#allocation3 + %s42]]
        %s627 = sld [smem:[#allocation3 + %s42]]
        %p628 = scmp.lt.s32.totalorder %s627, 2
        %s629 = scalar_select %p628, %s627, 2
        %s630 = scalar_lea.vmem %s8, %s629
        %s631 = sld [smem:[#allocation3 + %s42]]
        %s632 = sld [smem:[#allocation3 + %s42]]
        %p633 = scmp.lt.s32.totalorder %s632, 2
        %s634 = scalar_select %p633, %s632, 2
        %s635 = scalar_lea.vmem %s9, %s634
        %s636 = sld [smem:[#allocation3 + %s42]]
        %s637 = smul.u32 2, %s43
        %p638 = scmp.lt.s32.totalorder %s42, 3
        %s639 = scalar_select %p638, %s42, 3
        %p640 = scmp.lt.s32.totalorder %s637, 1
        %s641 = scalar_select %p640, %s637, 1
        %s642 = smul.addr %s639, 2
        %s643 = sadd.s32 %s641, %s642
        %s644 = smul.addr %s643, 8
        %s645 = scalar_lea.vmem %s10, %s644
        %s646 = smul.u32 2, %s43
        %v648 = vld [vmem:[%s498] sm:$0xf]
        %v649 = vld [vmem:[%s498 + $0x4] sm:$0xf]
        %v650 = vld [vmem:[%s508] sm:$0xf]
        %v651 = vld [vmem:[%s508 + $0x4] sm:$0xf]
        %v652 = vld [vmem:[%s508 + $0x8] sm:$0xf]
        %v653 = vld [vmem:[%s508 + $0xc] sm:$0xf]
        %v654 = vld [vmem:[%s617] sm:$0x1]
        %v656 = vperm.slane %v654, 0
        %v660 = vunpack.c.l.b16 %v648
        %v661 = vunpack.c.l.b16 %v649
        %v662 = vpack.c.b16 %v661, %v660
        %v667 = vunpack.c.l.b16 %v650
        %v668 = vunpack.c.l.b16 %v651
        %v669 = vunpack.c.l.b16 %v652
        %v670 = vunpack.c.l.b16 %v653
        %v671 = vpack.c.b16 %v668, %v667
        %v672 = vpack.c.b16 %v670, %v669
        %vm675 = vcmask 261120
        %v677 = vsel %vm675, %v662, 0
        %679 = vmatpush.bf16.msra.mxu0 0
        %680 = vmatpush.bf16.msra.mxu0 0
        %681 = vmatpush.bf16.msra.mxu0 0
        %682 = vmatpush.bf16.msra.mxu0 0
        %683 = vmatpush.bf16.msra.mxu0 0
        %684 = vmatpush.bf16.msra.mxu0 0
        %685 = vmatpush.bf16.msra.mxu0 %v672
        %686 = vmatpush.bf16.msra.mxu0 %v671
        %687 = vmatmul.bf16.gmra.mxu0 %v677
        %v688 = vpop.f32.mrf.mxu0
        %v689 = vadd.f32 %v656, %v688
        %v690 = vpop.f32.mrf.mxu0
        %v691 = vadd.f32 %v656, %v690
        %692 = vdwg.mxu0
        %v693 = vtanh.pop %v689
        %v694 = vtanh.pop %v691
        %v695 = vpack.c.bf16 %v694, %v693
        %v696 = vld [vmem:[%s518] sm:$0xf]
        %v697 = vld [vmem:[%s518 + $0x4] sm:$0xf]
        %v698 = vld [vmem:[%s518 + $0x8] sm:$0xf]
        %v699 = vld [vmem:[%s518 + $0xc] sm:$0xf]
        %v700 = vld [vmem:[%s518 + $0x10] sm:$0xf]
        %v701 = vld [vmem:[%s518 + $0x14] sm:$0xf]
        %v702 = vld [vmem:[%s518 + $0x18] sm:$0xf]
        %v703 = vld [vmem:[%s518 + $0x1c] sm:$0xf]
        %v704 = vld [vmem:[%s623] sm:$0x1]
        %v706 = vperm.slane %v704, 0
        %v716 = vunpack.c.l.b16 %v696
        %v717 = vunpack.c.l.b16 %v697
        %v718 = vunpack.c.l.b16 %v698
        %v719 = vunpack.c.l.b16 %v699
        %v720 = vunpack.c.l.b16 %v700
        %v721 = vunpack.c.l.b16 %v701
        %v722 = vunpack.c.l.b16 %v702
        %v723 = vunpack.c.l.b16 %v703
        %v724 = vpack.c.b16 %v717, %v716
        %v725 = vpack.c.b16 %v719, %v718
        %v726 = vpack.c.b16 %v721, %v720
        %v727 = vpack.c.b16 %v723, %v722
        %vm732 = vcmask 523264
        %v734 = vsel %vm732, %v695, 0
        %736 = vmatpush.bf16.msra.mxu0 0
        %737 = vmatpush.bf16.msra.mxu0 0
        %738 = vmatpush.bf16.msra.mxu0 0
        %739 = vmatpush.bf16.msra.mxu0 0
        %740 = vmatpush.bf16.msra.mxu0 %v727
        %741 = vmatpush.bf16.msra.mxu0 %v726
        %742 = vmatpush.bf16.msra.mxu0 %v725
        %743 = vmatpush.bf16.msra.mxu0 %v724
        %744 = vmatmul.bf16.gmra.mxu0 %v734
        %v745 = vpop.f32.mrf.mxu0
        %v746 = vadd.f32 %v706, %v745
        %v747 = vpop.f32.mrf.mxu0
        %v748 = vadd.f32 %v706, %v747
        %749 = vdwg.mxu0
        %v750 = vtanh.pop %v746
        %v751 = vtanh.pop %v748
        %v752 = vadd.f32 %v750, %v693
        %v753 = vadd.f32 %v751, %v694
        %v754 = vpack.c.bf16 %v753, %v752
        %v755 = vld [vmem:[%s528] sm:$0xf]
        %v756 = vld [vmem:[%s528 + $0x4] sm:$0xf]
        %v757 = vld [vmem:[%s528 + $0x8] sm:$0xf]
        %v758 = vld [vmem:[%s528 + $0xc] sm:$0xf]
        %v759 = vld [vmem:[%s528 + $0x10] sm:$0xf]
        %v760 = vld [vmem:[%s528 + $0x14] sm:$0xf]
        %v761 = vld [vmem:[%s528 + $0x18] sm:$0xf]
        %v762 = vld [vmem:[%s528 + $0x1c] sm:$0xf]
        %v763 = vld [vmem:[%s537] sm:$0x1]
        %v765 = vperm.slane %v763, 0
        %v775 = vunpack.c.l.b16 %v755
        %v776 = vunpack.c.l.b16 %v756
        %v777 = vunpack.c.l.b16 %v757
        %v778 = vunpack.c.l.b16 %v758
        %v779 = vunpack.c.l.b16 %v759
        %v780 = vunpack.c.l.b16 %v760
        %v781 = vunpack.c.l.b16 %v761
        %v782 = vunpack.c.l.b16 %v762
        %v783 = vpack.c.b16 %v776, %v775
        %v784 = vpack.c.b16 %v778, %v777
        %v785 = vpack.c.b16 %v780, %v779
        %v786 = vpack.c.b16 %v782, %v781
        %v792 = vsel %vm732, %v754, 0
        %794 = vmatpush.bf16.msra.mxu0 0
        %795 = vmatpush.bf16.msra.mxu0 0
        %796 = vmatpush.bf16.msra.mxu0 0
        %797 = vmatpush.bf16.msra.mxu0 0
        %798 = vmatpush.bf16.msra.mxu0 %v786
        %799 = vmatpush.bf16.msra.mxu0 %v785
        %800 = vmatpush.bf16.msra.mxu0 %v784
        %801 = vmatpush.bf16.msra.mxu0 %v783
        %802 = vmatmul.bf16.gmra.mxu0 %v792
        %v803 = vpop.f32.mrf.mxu0
        %v804 = vadd.f32 %v765, %v803
        %v805 = vpop.f32.mrf.mxu0
        %v806 = vadd.f32 %v765, %v805
        %807 = vdwg.mxu0
        %v808 = vtanh.pop %v804
        %v809 = vtanh.pop %v806
        %v810 = vadd.f32 %v808, %v752
        %v811 = vadd.f32 %v809, %v753
        %v812 = vld [vmem:[%s630] sm:$0x1]
        %v814 = vperm.slane %v812, 0
        %v816 = vmul.f32 %v810, %v814
        %v817 = vmul.f32 %v811, %v814
        %v818 = vsel %vm732, %v816, 0.0
        %819 = vadd.xlane.f32.xlu0 %v818
        %v820 = vpop.xlane.xlu0 %819
        %v821 = vsel %vm732, %v817, 0.0
        %822 = vadd.xlane.f32.xlu0 %v821
        %v823 = vpop.xlane.xlu0 %822
        %v824 = vld [vmem:[%s635] sm:$0x1]
        %v826 = vperm.slane %v824, 0
        %v828 = vadd.f32 %v820, %v826
        %v829 = vadd.f32 %v823, %v826
        %vm830 = vcmask 7168
        %831 = vst.msk [vmem:[%s645] sm:$0xff] %vm830, %v828
        %832 = vst.msk [vmem:[%s645 + $0x8] sm:$0xff] %vm830, %v829
        %s833 = smul.u32 2, %s43
        %p834 = scmp.lt.s32.totalorder %s42, 3
        %s835 = scalar_select %p834, %s42, 3
        %p836 = scmp.lt.s32.totalorder %s833, 1
        %s837 = scalar_select %p836, %s833, 1
        %s838 = smul.addr %s835, 2
        %s839 = sadd.s32 %s837, %s838
        %s840 = smul.addr %s839, 8
        %s841 = scalar_lea.vmem %s10, %s840
        // Predicated region
        $region77: #{tpu_custom_call.1} parent=55 // pred_check
          %p842 = pneg %p322
        $region78: #{tpu_custom_call.1} parent=55 // pred_check_branch
          %844 = sbr.rel (%p842) target = $region80
        $region79: #{tpu_custom_call.1} parent=55 // pred_region
          %s845 = smul.u32 2, %s43
        $region80: #{tpu_custom_call.1} parent=55 // pred_fallthru
          _
      $region56: #{tpu_custom_call.1} parent=5 // pred_fallthru
        _
      %p846 = scmp.le.s32.totalorder 2, %s33
      // Predicated region
      $region81: #{tpu_custom_call.1} parent=5 // pred_check
        %p847 = pneg %p846
      $region82: #{tpu_custom_call.1} parent=5 // pred_check_branch
        %849 = sbr.rel (%p847) target = $region84
      $region83: #{tpu_custom_call.1} parent=5 // pred_region
        %s850 = ssub.s32 %s33, 2
        // Predicated region
        $region85: #{tpu_custom_call.1} parent=83 // pred_check
          %p851 = pneg %p328
        $region86: #{tpu_custom_call.1} parent=83 // pred_check_branch
          %853 = sbr.rel (%p851) target = $region88
        $region87: #{tpu_custom_call.1} parent=83 // pred_region
          %s854 = smul.u32 2, %s45
          %p855 = scmp.lt.s32.totalorder %s44, 3
          %s856 = scalar_select %p855, %s44, 3
          %p857 = scmp.lt.s32.totalorder %s854, 1
          %s858 = scalar_select %p857, %s854, 1
          %s859 = smul.addr %s856, 2
          %s860 = sadd.s32 %s858, %s859
          %s861 = smul.addr %s860, 8
          %s862 = scalar_lea.vmem %s10, %s861
        $region88: #{tpu_custom_call.1} parent=83 // pred_fallthru
          _
      $region84: #{tpu_custom_call.1} parent=5 // pred_fallthru
        _
    $region6: #{tpu_custom_call.1} parent=1 // loop_footer
      %s37 = sadd.s32 1, %s33
    $region7: #{tpu_custom_call.1} parent=1 // loop_footer_branch
      %32 = sbr.rel target = $region3
    $region8: #{tpu_custom_call.1} parent=1 // loop_exit
      _
    %863 = vsyncpa [#allocation5], 1
    %s864 = scalar_lea.sflag [#allocation5], 1
    %865 = vsyncpa %s864, 1
    %866 = vsyncpa [#allocation7], 1
    %s867 = scalar_lea.sflag [#allocation7], 1
    %868 = vsyncpa %s867, 1
    %869 = vsyncpa [#allocation10], 1
    %s870 = scalar_lea.sflag [#allocation10], 1
    %871 = vsyncpa %s870, 1

</llo_original>
